<compile_context>
chip_gen: v5e
topology: v5e:2x2
jax: 0.10.0
libtpu: 0.0.40
codegen_flags: <defaults>
</compile_context>

<pallas_src>
import math

import jax
import jax.numpy as jnp
from jax import lax
from jax.experimental import pallas as pl
from jax.experimental.pallas import tpu as pltpu

_SQRT_HALF = 0.7071067811865476     # 1/sqrt(2)
_GELU_TANH_C = 0.7978845608028654   # sqrt(2/pi)


def _round_up(x, n):
    return ((x + n - 1) // n) * n


def _chip_config():
    """Per-generation tiling defaults (row/inner tiles, VMEM budget, megacore, MXU width)."""
    kind = ""
    try:
        kind = jax.devices()[0].device_kind.lower()
    except Exception:
        pass
    if ("v5 lite" in kind) or ("v5e" in kind) or ("v5lite" in kind):
        # v5e: 197 TF/s / ~0.82 TB/s -> ~240 FLOP/byte crossover; 128 MiB physical VMEM.
        return dict(name="v5e", row_tile=256, inner_tile=512,
                    vmem_budget=96 << 20, two_cores=False, mxu256=False)
    if "v6" in kind:
        # v6e: 918 TF/s / ~1.4 TB/s -> ~650 FLOP/byte; 128 MiB physical VMEM.
        return dict(name="v6e", row_tile=1024, inner_tile=1024,
                    vmem_budget=100 << 20, two_cores=False, mxu256=True)
    if ("v7" in kind) or ("7x" in kind):
        # v7x: 996 TF/s / ~3.2 TB/s -> ~310 FLOP/byte; only 64 MiB VMEM, 2 TCs/chip.
        return dict(name="v7x", row_tile=512, inner_tile=512,
                    vmem_budget=48 << 20, two_cores=True, mxu256=True)
    # Conservative fallback (v4/v5p/unknown).
    return dict(name="unknown", row_tile=512, inner_tile=512,
                vmem_budget=64 << 20, two_cores=False, mxu256=False)


def _vmem_working_set(row_tile, inner_tile, d_pad, stream_bytes, w_bytes):
    """Estimate VMEM bytes: double-buffered x/out/W1/W2/bias streams + kernel scratch."""
    act = 2 * row_tile * d_pad * stream_bytes * 2            # x + out, double-buffered
    wts = 2 * 2 * d_pad * inner_tile * w_bytes                # W1 + W2, double-buffered
    small = 2 * (3 * d_pad + inner_tile) * 4                  # gamma/beta/b2 + b1 (f32)
    scratch = row_tile * d_pad * (4 + w_bytes)                # f32 acc + compute-dtype xn
    return act + wts + small + scratch


def _make_ffn_kernel(d_actual, d_pad, compute_dtype, approximate_gelu):
    """Build the kernel body (closure over static padding / dtype / GELU config)."""
    inv_d = 1.0 / float(d_actual)
    needs_mask = d_actual != d_pad

    def kernel(x_ref, gamma_ref, beta_ref, w1_ref, b1_ref, w2_ref, b2_ref,
               o_ref, acc_ref, xn_ref):
        k = pl.program_id(1)

        # First inner-chunk step for this row tile: LayerNorm (f32 stats) once,
        # cache normalized activations (compute dtype) and zero the accumulator.
        @pl.when(k == 0)
        def _():
            # NOTE: the unmasked mean is only correct because the wrapper zero-pads
            # x columns beyond d_actual; the variance/xn use an explicit mask.
            x = x_ref[...].astype(jnp.float32)
            mean = jnp.sum(x, axis=-1, keepdims=True) * inv_d
            diff = x - mean
            if needs_mask:
                col = lax.broadcasted_iota(jnp.int32, (1, d_pad), 1)
                diff = jnp.where(col < d_actual, diff, 0.0)
            var = jnp.sum(diff * diff, axis=-1, keepdims=True) * inv_d
            xn = diff * lax.rsqrt(var + 1e-5)   # torch LayerNorm eps default
            xn = (xn * gamma_ref[...].astype(jnp.float32)
                  + beta_ref[...].astype(jnp.float32))
            xn_ref[...] = xn.astype(compute_dtype)
            acc_ref[...] = jnp.zeros_like(acc_ref)

        # Linear 1 chunk (D -> inner_tile) on the MXU, f32 accumulation.
        h = jnp.dot(xn_ref[...], w1_ref[...], preferred_element_type=jnp.float32)
        h = h + b1_ref[...].astype(jnp.float32)

        if approximate_gelu:
            # tanh-approx GELU (EUP path) when exact torch parity is not required.
            h = 0.5 * h * (1.0 + jnp.tanh(_GELU_TANH_C * (h + 0.044715 * h * h * h)))
        else:
            # Exact (erf-based) GELU in f32 - matches torch.nn.GELU() default.
            h = 0.5 * h * (1.0 + lax.erf(h * _SQRT_HALF))

        # Linear 2 chunk (inner_tile -> D); accumulate over inner chunks in f32.
        acc_ref[...] += jnp.dot(h.astype(compute_dtype), w2_ref[...],
                                preferred_element_type=jnp.float32)

        # Last inner-chunk step: add output bias and write the row tile.
        @pl.when(k == pl.num_programs(1) - 1)
        def _():
            o_ref[...] = (acc_ref[...]
                          + b2_ref[...].astype(jnp.float32)).astype(o_ref.dtype)

    return kernel


def prepare_ffn_params(gamma, beta, w1, b1, w2, b2, *, compute_dtype=jnp.bfloat16):
    """Pad + cast the FFN parameters ONCE (hoisted out of the per-call path).

    gamma/beta: (D,). w1: (D, 4D), b1: (4D,), w2: (4D, D), b2: (D,).
    """
    cfg = _chip_config()
    d, inner = w1.shape
    assert w2.shape == (inner, d)

    d_pad = _round_up(d, 128)
    # 256x256 MXUs (v6e/v7x): avoid a 128-odd K/N edge tile when D is large.
    if cfg["mxu256"] and d_pad > 128 and d_pad % 256 == 128:
        d_pad += 128
    inner_pad = _round_up(inner, 256 if cfg["mxu256"] else 128)

    return dict(
        cfg=cfg, d=d, inner=inner, d_pad=d_pad, inner_pad=inner_pad,
        compute_dtype=compute_dtype,
        gamma=jnp.pad(gamma.astype(jnp.float32), (0, d_pad - d)).reshape(1, d_pad),
        beta=jnp.pad(beta.astype(jnp.float32), (0, d_pad - d)).reshape(1, d_pad),
        w1=jnp.pad(w1, ((0, d_pad - d), (0, inner_pad - inner))).astype(compute_dtype),
        b1=jnp.pad(b1.astype(jnp.float32), (0, inner_pad - inner)).reshape(1, inner_pad),
        w2=jnp.pad(w2, ((0, inner_pad - inner), (0, d_pad - d))).astype(compute_dtype),
        b2=jnp.pad(b2.astype(jnp.float32), (0, d_pad - d)).reshape(1, d_pad),
    )


def ffn_pallas(x, params, *, row_tile=None, inner_tile=None, approximate_gelu=False):
    """Apply the FFN. x: (..., D); params from prepare_ffn_params()."""
    cfg = params["cfg"]
    d, inner = params["d"], params["inner"]
    d_pad, inner_pad = params["d_pad"], params["inner_pad"]
    compute_dtype = params["compute_dtype"]

    orig_shape = x.shape
    x2d = x.reshape(-1, d)
    m = x2d.shape[0]

    stream_dtype = compute_dtype                     # bf16 activation stream by default
    stream_bytes = jnp.dtype(stream_dtype).itemsize
    w_bytes = jnp.dtype(compute_dtype).itemsize

    # ---- tiling -------------------------------------------------------------------
    if row_tile is None:
        row_tile = cfg["row_tile"]
    if cfg["two_cores"] and m >= 32:
        # Keep >= 2 row tiles so both v7x TensorCores get work on the "parallel" axis.
        row_tile = min(row_tile, _round_up((m + 1) // 2, 16))
    row_tile = max(16, min(_round_up(row_tile, 16), _round_up(m, 16)))

    if inner_tile is None:
        inner_tile = cfg["inner_tile"]
    inner_tile = max(128, min(_round_up(inner_tile, 128), inner_pad))
    # inner_tile must be a multiple of 128 that divides inner_pad.
    cand = [t for t in range(128, inner_pad + 1, 128)
            if inner_pad % t == 0 and t <= inner_tile]
    cand.sort(reverse=True)
    ci = 0
    inner_tile = cand[ci]

    # ---- shrink tiles until the double-buffered working set fits the VMEM budget ---
    budget = int(cfg["vmem_budget"] * 0.85)          # leave compiler headroom
    while (_vmem_working_set(row_tile, inner_tile, d_pad, stream_bytes, w_bytes) > budget
           and ci + 1 < len(cand)):
        ci += 1
        inner_tile = cand[ci]
    while (_vmem_working_set(row_tile, inner_tile, d_pad, stream_bytes, w_bytes) > budget
           and row_tile > 64):
        row_tile = max(64, _round_up(row_tile // 2, 16))

    m_pad = _round_up(m, row_tile)
    grid = (m_pad // row_tile, inner_pad // inner_tile)

    # ---- pad + cast the activation stream (zeros are neutral given the masked LN) --
    x_p = jnp.pad(x2d.astype(stream_dtype), ((0, m_pad - m), (0, d_pad - d)))

    # Advisory cost estimate (includes W1/W2 re-streaming once per row tile).
    n_row_tiles = m_pad // row_tile
    cost = pl.CostEstimate(
        flops=4 * m * d * inner,                     # two matmuls
        transcendentals=m * inner,                   # erf/tanh per hidden element
        bytes_accessed=int(2 * m_pad * d_pad * stream_bytes
                           + n_row_tiles * 2 * d_pad * inner_pad * w_bytes
                           + n_row_tiles * (3 * d_pad + inner_pad) * 4),
    )

    kernel = _make_ffn_kernel(d, d_pad, compute_dtype, approximate_gelu)

    out = pl.pallas_call(
        kernel,
        out_shape=jax.ShapeDtypeStruct((m_pad, d_pad), stream_dtype),
        grid_spec=pltpu.PrefetchScalarGridSpec(
            num_scalar_prefetch=0,
            grid=grid,
            in_specs=[
                pl.BlockSpec((row_tile, d_pad), lambda i, k: (i, 0)),     # x rows
                pl.BlockSpec((1, d_pad), lambda i, k: (0, 0)),            # ln gamma
                pl.BlockSpec((1, d_pad), lambda i, k: (0, 0)),            # ln beta
                pl.BlockSpec((d_pad, inner_tile), lambda i, k: (0, k)),   # W1 slab
                pl.BlockSpec((1, inner_tile), lambda i, k: (0, k)),       # b1 slab
                pl.BlockSpec((inner_tile, d_pad), lambda i, k: (k, 0)),   # W2 slab
                pl.BlockSpec((1, d_pad), lambda i, k: (0, 0)),            # b2
            ],
            out_specs=pl.BlockSpec((row_tile, d_pad), lambda i, k: (i, 0)),
            scratch_shapes=[
                pltpu.VMEM((row_tile, d_pad), jnp.float32),    # f32 accumulator
                pltpu.VMEM((row_tile, d_pad), compute_dtype),  # cached LayerNorm output
            ],
        ),
        compiler_params=pltpu.CompilerParams(
            dimension_semantics=("parallel", "arbitrary"),
            vmem_limit_bytes=int(cfg["vmem_budget"]),
        ),
        cost_estimate=cost,
    )(x_p, params["gamma"], params["beta"], params["w1"], params["b1"],
      params["w2"], params["b2"])

    return out[:m, :d].astype(x.dtype).reshape(orig_shape)


def _ffn_reference(x, gamma, beta, w1, b1, w2, b2):
    xf = x.astype(jnp.float32)
    mean = jnp.mean(xf, axis=-1, keepdims=True)
    var = jnp.mean((xf - mean) ** 2, axis=-1, keepdims=True)
    xn = (xf - mean) / jnp.sqrt(var + 1e-5) * gamma + beta
    h = xn @ w1 + b1
    h = 0.5 * h * (1.0 + lax.erf(h * _SQRT_HALF))
    return (h @ w2 + b2).astype(x.dtype)


if __name__ == "__main__":
    key = jax.random.PRNGKey(0)

    # Small shapes consistent with FFN(dim): batch=2, seq=8, dim=32, mult=4 -> inner=128.
    batch, seq, dim, mult = 2, 8, 32, 4
    inner = dim * mult

    keys = jax.random.split(key, 6)
    x = jax.random.normal(keys[0], (batch, seq, dim), dtype=jnp.float32)

    # Deterministic parameter init (uniform like torch Linear default: +-1/sqrt(fan_in)).
    lim1 = 1.0 / math.sqrt(dim)
    lim2 = 1.0 / math.sqrt(inner)
    w1 = jax.random.uniform(keys[1], (dim, inner), jnp.float32, -lim1, lim1)   # (in, out)
    b1 = jax.random.uniform(keys[2], (inner,), jnp.float32, -lim1, lim1)
    w2 = jax.random.uniform(keys[3], (inner, dim), jnp.float32, -lim2, lim2)   # (in, out)
    b2 = jax.random.uniform(keys[4], (dim,), jnp.float32, -lim2, lim2)
    gamma = jnp.ones((dim,), jnp.float32)    # LayerNorm weight init
    beta = jnp.zeros((dim,), jnp.float32)    # LayerNorm bias init

    y_ref = _ffn_reference(x, gamma, beta, w1, b1, w2, b2)

    # Fast path: bf16 MXU operands + bf16 activation stream, f32 LN stats / accumulation.
    params_bf16 = prepare_ffn_params(gamma, beta, w1, b1, w2, b2,
                                     compute_dtype=jnp.bfloat16)
    y_bf16 = jax.block_until_ready(ffn_pallas(x, params_bf16))
    assert y_bf16.shape == x.shape
    assert jnp.allclose(y_bf16, y_ref, atol=3e-2, rtol=3e-2), "bf16 path mismatch"

    # Full-precision path (same kernel, f32 operands) for a tighter numerics check.
    # (Tolerance accounts for possible bf16-pass MXU rounding of f32 operands.)
    params_f32 = prepare_ffn_params(gamma, beta, w1, b1, w2, b2,
                                    compute_dtype=jnp.float32)
    y_f32 = jax.block_until_ready(ffn_pallas(x, params_f32))
    assert jnp.allclose(y_f32, y_ref, atol=2e-3, rtol=2e-3), "f32 path mismatch"

    print("KERNEL_OK")
</pallas_src>

<mosaic_0001>
module attributes {stable_mosaic.version = 11 : i64} {
  func.func @kernel(%arg0: i32, %arg1: i32, %arg2: memref<16x128xbf16, #tpu.memory_space<vmem>>, %arg3: memref<1x128xf32, #tpu.memory_space<vmem>>, %arg4: memref<1x128xf32, #tpu.memory_space<vmem>>, %arg5: memref<128x128xbf16, #tpu.memory_space<vmem>>, %arg6: memref<1x128xf32, #tpu.memory_space<vmem>>, %arg7: memref<128x128xbf16, #tpu.memory_space<vmem>>, %arg8: memref<1x128xf32, #tpu.memory_space<vmem>>, %arg9: memref<16x128xbf16, #tpu.memory_space<vmem>>, %arg10: memref<16x128xf32, #tpu.memory_space<vmem>>, %arg11: memref<16x128xbf16, #tpu.memory_space<vmem>>) attributes {dimension_semantics = [#tpu.dimension_semantics<parallel>, #tpu.dimension_semantics<arbitrary>], iteration_bounds = array<i64: 1, 1>, scalar_prefetch = 0 : i64, scratch_operands = 2 : i64, tpu.core_type = #tpu.core_type<tc>, window_params = [{transform_indices = @transform_0, window_bounds = array<i64: 16, 128>}, {pipeline_mode = #tpu.pipeline_mode<synchronous>, transform_indices = @transform_1, window_bounds = array<i64: 1, 128>}, {pipeline_mode = #tpu.pipeline_mode<synchronous>, transform_indices = @transform_2, window_bounds = array<i64: 1, 128>}, {transform_indices = @transform_3, window_bounds = array<i64: 128, 128>}, {transform_indices = @transform_4, window_bounds = array<i64: 1, 128>}, {transform_indices = @transform_5, window_bounds = array<i64: 128, 128>}, {pipeline_mode = #tpu.pipeline_mode<synchronous>, transform_indices = @transform_6, window_bounds = array<i64: 1, 128>}, {transform_indices = @transform_7, window_bounds = array<i64: 16, 128>}]} {
    %c0_i32 = arith.constant 0 : i32
    %0 = arith.cmpi eq, %arg1, %c0_i32 : i32
    %1 = arith.extui %0 : i1 to i32
    %c0_i32_0 = arith.constant 0 : i32
    %2 = arith.cmpi ne, %1, %c0_i32_0 : i32
    scf.if %2 {
      %c0_18 = arith.constant 0 : index
      %c0_19 = arith.constant 0 : index
      %26 = vector.load %arg2[%c0_18, %c0_19] : memref<16x128xbf16, #tpu.memory_space<vmem>>, vector<16x128xbf16>
      %27 = arith.extf %26 : vector<16x128xbf16> to vector<16x128xf32>
      %cst_20 = arith.constant dense<0.000000e+00> : vector<16xf32>
      %28 = vector.multi_reduction <add>, %27, %cst_20 [1] : vector<16x128xf32> to vector<16xf32>
      %29 = vector.shape_cast %28 : vector<16xf32> to vector<16x1xf32>
      %cst_21 = arith.constant 3.125000e-02 : f32
      %30 = vector.broadcast %cst_21 : f32 to vector<16x1xf32>
      %31 = arith.mulf %29, %30 : vector<16x1xf32>
      %32 = vector.broadcast %31 : vector<16x1xf32> to vector<16x128xf32>
      %33 = arith.subf %27, %32 : vector<16x128xf32>
      %34 = tpu.iota {dimensions = array<i32: 1>} : vector<1x128xi32>
      %c32_i32 = arith.constant 32 : i32
      %35 = vector.broadcast %c32_i32 : i32 to vector<1x128xi32>
      %36 = arith.cmpi slt, %34, %35 : vector<1x128xi32>
      %cst_22 = arith.constant 0.000000e+00 : f32
      %37 = vector.shape_cast %36 : vector<1x128xi1> to vector<1x128xi1>
      %38 = vector.broadcast %37 : vector<1x128xi1> to vector<16x128xi1>
      %39 = vector.broadcast %cst_22 : f32 to vector<16x128xf32>
      %40 = arith.select %38, %33, %39 : vector<16x128xi1>, vector<16x128xf32>
      %41 = arith.mulf %40, %40 : vector<16x128xf32>
      %cst_23 = arith.constant dense<0.000000e+00> : vector<16xf32>
      %42 = vector.multi_reduction <add>, %41, %cst_23 [1] : vector<16x128xf32> to vector<16xf32>
      %43 = vector.shape_cast %42 : vector<16xf32> to vector<16x1xf32>
      %cst_24 = arith.constant 3.125000e-02 : f32
      %44 = vector.broadcast %cst_24 : f32 to vector<16x1xf32>
      %45 = arith.mulf %43, %44 : vector<16x1xf32>
      %cst_25 = arith.constant 9.99999974E-6 : f32
      %46 = vector.broadcast %cst_25 : f32 to vector<16x1xf32>
      %47 = arith.addf %45, %46 : vector<16x1xf32>
      %48 = math.rsqrt %47 : vector<16x1xf32>
      %49 = vector.broadcast %48 : vector<16x1xf32> to vector<16x128xf32>
      %50 = arith.mulf %40, %49 : vector<16x128xf32>
      %c0_26 = arith.constant 0 : index
      %c0_27 = arith.constant 0 : index
      %51 = vector.load %arg3[%c0_26, %c0_27] : memref<1x128xf32, #tpu.memory_space<vmem>>, vector<1x128xf32>
      %52 = vector.broadcast %51 : vector<1x128xf32> to vector<16x128xf32>
      %53 = arith.mulf %50, %52 : vector<16x128xf32>
      %c0_28 = arith.constant 0 : index
      %c0_29 = arith.constant 0 : index
      %54 = vector.load %arg4[%c0_28, %c0_29] : memref<1x128xf32, #tpu.memory_space<vmem>>, vector<1x128xf32>
      %55 = vector.broadcast %54 : vector<1x128xf32> to vector<16x128xf32>
      %56 = arith.addf %53, %55 : vector<16x128xf32>
      %57 = arith.truncf %56 : vector<16x128xf32> to vector<16x128xbf16>
      %c0_30 = arith.constant 0 : index
      %c0_31 = arith.constant 0 : index
      %58 = vector.load %arg11[%c0_30, %c0_31] : memref<16x128xbf16, #tpu.memory_space<vmem>>, vector<16x128xbf16>
      tpu.vector_store %arg11[%c0_30, %c0_31], %57 {strides = array<i32>} : memref<16x128xbf16, #tpu.memory_space<vmem>>, vector<16x128xbf16>,
      %cst_32 = arith.constant 0.000000e+00 : f32
      %59 = vector.broadcast %cst_32 : f32 to vector<16x128xf32>
      %c0_33 = arith.constant 0 : index
      %c0_34 = arith.constant 0 : index
      %60 = vector.load %arg10[%c0_33, %c0_34] : memref<16x128xf32, #tpu.memory_space<vmem>>, vector<16x128xf32>
      tpu.vector_store %arg10[%c0_33, %c0_34], %59 {strides = array<i32>} : memref<16x128xf32, #tpu.memory_space<vmem>>, vector<16x128xf32>,
    } else {
    }
    %c0 = arith.constant 0 : index
    %c0_1 = arith.constant 0 : index
    %3 = vector.load %arg11[%c0, %c0_1] : memref<16x128xbf16, #tpu.memory_space<vmem>>, vector<16x128xbf16>
    %c0_2 = arith.constant 0 : index
    %c0_3 = arith.constant 0 : index
    %4 = vector.load %arg5[%c0_2, %c0_3] : memref<128x128xbf16, #tpu.memory_space<vmem>>, vector<128x128xbf16>
    %cst = arith.constant dense<0.000000e+00> : vector<16x128xf32>
    %5 = tpu.matmul %3, %4, %cst {dimension_numbers = #tpu.dot_dimension_numbers<[1], [0], [0], [1], [0, 0, 1, 1], [], []>} : vector<16x128xbf16>, vector<128x128xbf16>, vector<16x128xf32> -> vector<16x128xf32>
    %c0_4 = arith.constant 0 : index
    %c0_5 = arith.constant 0 : index
    %6 = vector.load %arg6[%c0_4, %c0_5] : memref<1x128xf32, #tpu.memory_space<vmem>>, vector<1x128xf32>
    %7 = vector.broadcast %6 : vector<1x128xf32> to vector<16x128xf32>
    %8 = arith.addf %5, %7 : vector<16x128xf32>
    %cst_6 = arith.constant 5.000000e-01 : f32
    %9 = vector.broadcast %cst_6 : f32 to vector<16x128xf32>
    %10 = arith.mulf %9, %8 : vector<16x128xf32>
    %cst_7 = arith.constant 0.707106769 : f32
    %11 = vector.broadcast %cst_7 : f32 to vector<16x128xf32>
    %12 = arith.mulf %8, %11 : vector<16x128xf32>
    %13 = math.erf %12 : vector<16x128xf32>
    %cst_8 = arith.constant 1.000000e+00 : f32
    %14 = vector.broadcast %cst_8 : f32 to vector<16x128xf32>
    %15 = arith.addf %14, %13 : vector<16x128xf32>
    %16 = arith.mulf %10, %15 : vector<16x128xf32>
    %c0_9 = arith.constant 0 : index
    %c0_10 = arith.constant 0 : index
    %17 = vector.load %arg10[%c0_9, %c0_10] : memref<16x128xf32, #tpu.memory_space<vmem>>, vector<16x128xf32>
    %18 = arith.truncf %16 : vector<16x128xf32> to vector<16x128xbf16>
    %c0_11 = arith.constant 0 : index
    %c0_12 = arith.constant 0 : index
    %19 = vector.load %arg7[%c0_11, %c0_12] : memref<128x128xbf16, #tpu.memory_space<vmem>>, vector<128x128xbf16>
    %cst_13 = arith.constant dense<0.000000e+00> : vector<16x128xf32>
    %20 = tpu.matmul %18, %19, %cst_13 {dimension_numbers = #tpu.dot_dimension_numbers<[1], [0], [0], [1], [0, 0, 1, 1], [], []>} : vector<16x128xbf16>, vector<128x128xbf16>, vector<16x128xf32> -> vector<16x128xf32>
    %21 = arith.addf %17, %20 : vector<16x128xf32>
    %c0_14 = arith.constant 0 : index
    %c0_15 = arith.constant 0 : index
    %22 = vector.load %arg10[%c0_14, %c0_15] : memref<16x128xf32, #tpu.memory_space<vmem>>, vector<16x128xf32>
    tpu.vector_store %arg10[%c0_14, %c0_15], %21 {strides = array<i32>} : memref<16x128xf32, #tpu.memory_space<vmem>>, vector<16x128xf32>,
    %c0_i32_16 = arith.constant 0 : i32
    %23 = arith.cmpi eq, %arg1, %c0_i32_16 : i32
    %24 = arith.extui %23 : i1 to i32
    %c0_i32_17 = arith.constant 0 : i32
    %25 = arith.cmpi ne, %24, %c0_i32_17 : i32
    scf.if %25 {
      %c0_18 = arith.constant 0 : index
      %c0_19 = arith.constant 0 : index
      %26 = vector.load %arg10[%c0_18, %c0_19] : memref<16x128xf32, #tpu.memory_space<vmem>>, vector<16x128xf32>
      %c0_20 = arith.constant 0 : index
      %c0_21 = arith.constant 0 : index
      %27 = vector.load %arg8[%c0_20, %c0_21] : memref<1x128xf32, #tpu.memory_space<vmem>>, vector<1x128xf32>
      %28 = vector.broadcast %27 : vector<1x128xf32> to vector<16x128xf32>
      %29 = arith.addf %26, %28 : vector<16x128xf32>
      %30 = arith.truncf %29 : vector<16x128xf32> to vector<16x128xbf16>
      %c0_22 = arith.constant 0 : index
      %c0_23 = arith.constant 0 : index
      %31 = vector.load %arg9[%c0_22, %c0_23] : memref<16x128xbf16, #tpu.memory_space<vmem>>, vector<16x128xbf16>
      tpu.vector_store %arg9[%c0_22, %c0_23], %30 {strides = array<i32>} : memref<16x128xbf16, #tpu.memory_space<vmem>>, vector<16x128xbf16>,
    } else {
    }
    return
  }
  func.func @transform_0(%arg0: i32, %arg1: i32) -> (i32, i32) {
    %c0_i32 = arith.constant 0 : i32
    %c0_i32_0 = arith.constant 0 : i32
    return %arg0, %c0_i32 : i32, i32
  }
  func.func @transform_1(%arg0: i32, %arg1: i32) -> (i32, i32) {
    %c0_i32 = arith.constant 0 : i32
    %c0_i32_0 = arith.constant 0 : i32
    %c0_i32_1 = arith.constant 0 : i32
    return %c0_i32, %c0_i32_0 : i32, i32
  }
  func.func @transform_2(%arg0: i32, %arg1: i32) -> (i32, i32) {
    %c0_i32 = arith.constant 0 : i32
    %c0_i32_0 = arith.constant 0 : i32
    %c0_i32_1 = arith.constant 0 : i32
    return %c0_i32, %c0_i32_0 : i32, i32
  }
  func.func @transform_3(%arg0: i32, %arg1: i32) -> (i32, i32) {
    %c0_i32 = arith.constant 0 : i32
    %c0_i32_0 = arith.constant 0 : i32
    return %c0_i32, %arg1 : i32, i32
  }
  func.func @transform_4(%arg0: i32, %arg1: i32) -> (i32, i32) {
    %c0_i32 = arith.constant 0 : i32
    %c0_i32_0 = arith.constant 0 : i32
    return %c0_i32, %arg1 : i32, i32
  }
  func.func @transform_5(%arg0: i32, %arg1: i32) -> (i32, i32) {
    %c0_i32 = arith.constant 0 : i32
    %c0_i32_0 = arith.constant 0 : i32
    return %arg1, %c0_i32 : i32, i32
  }
  func.func @transform_6(%arg0: i32, %arg1: i32) -> (i32, i32) {
    %c0_i32 = arith.constant 0 : i32
    %c0_i32_0 = arith.constant 0 : i32
    %c0_i32_1 = arith.constant 0 : i32
    return %c0_i32, %c0_i32_0 : i32, i32
  }
  func.func @transform_7(%arg0: i32, %arg1: i32) -> (i32, i32) {
    %c0_i32 = arith.constant 0 : i32
    %c0_i32_0 = arith.constant 0 : i32
    return %arg0, %c0_i32 : i32, i32
  }
}

</mosaic_0001>

<llo_original>
// kernel: tpu_custom_call.1
$region0: #{tpu_custom_call.1}
  #allocation0 [shape = 'u32[]', space=smem, size = 0x4, offset = 0x4, fixed_abs, tag = 'smem constant byte address 0x4 - core index']
  #allocation1 [shape = 'u32[72,128]{1,0:T(1,128)}', space=vmem, size = 0x9000, scoped, tag = 'internal scratch']
  #allocation2 [shape = 'f32[16,128]{1,0:T(8,128)}', space=vmem, size = 0x2000, scoped, tag = 'scratch operand']
  #allocation3 [shape = 'bf16[16,128]{1,0:T(8,128)(2,1)}', space=vmem, size = 0x1000, scoped, tag = 'scratch operand']
  %s0 = inlined_call_operand.hbm [shape: bf16[16,128], index: 0, kind: input, shape index: {}]
  %s1 = inlined_call_operand.hbm [shape: f32[1,128], index: 1, kind: input, shape index: {}]
  %s2 = inlined_call_operand.vmem [shape: f32[1,128], index: 2, kind: input, shape index: {}]
  %s3 = inlined_call_operand.hbm [shape: bf16[128,128], index: 3, kind: input, shape index: {}]
  %s4 = inlined_call_operand.vmem [shape: f32[1,128], index: 4, kind: input, shape index: {}]
  %s5 = inlined_call_operand.hbm [shape: bf16[128,128], index: 5, kind: input, shape index: {}]
  %s6 = inlined_call_operand.vmem [shape: f32[1,128], index: 6, kind: input, shape index: {}]
  %s7 = inlined_call_operand.hbm [shape: bf16[16,128], index: 7, kind: output, shape index: {}]
  %s8 = sld [smem:[#allocation0]]
  $region62: #{tpu_custom_call.1} parent=0
    _
  %s10 = ssub.s32 1, %s8
  %s11 = scalar_select 0, %s10, %s8
  $region1: #{tpu_custom_call.1} parent=0
    #allocation4 [shape = 'u8[4096]{0}', space=vmem, size = 0x1000, scoped, tag = 'input window, operand 0, single buffered']
    #allocation5 [shape = 's32[1]{0}', space=sflag, size = 0x4, scoped, tag = 'scoped memory for tpu_custom_call.1']
    #allocation6 [shape = 's32[1]{0}', space=sflag, size = 0x4, scoped, tag = 'scoped memory for tpu_custom_call.1']
    #allocation7 [shape = 'u8[512]{0}', space=vmem, size = 0x400, scoped, tag = 'input window, operand 1, single buffered']
    #allocation8 [shape = 's32[1]{0}', space=sflag, size = 0x4, scoped, tag = 'scoped memory for tpu_custom_call.1']
    #allocation9 [shape = 'u8[32768]{0}', space=vmem, size = 0x8000, scoped, tag = 'input window, operand 3, single buffered']
    #allocation10 [shape = 'u8[32768]{0}', space=vmem, size = 0x8000, scoped, tag = 'input window, operand 5, single buffered']
    #allocation11 [shape = 's32[1]{0}', space=sflag, size = 0x4, scoped, tag = 'scoped memory for tpu_custom_call.1']
    #allocation12 [shape = 'u8[4096]{0}', space=vmem, size = 0x1000, scoped, tag = 'output window, operand 0, single buffered']
    %12 = vsyncpa [#allocation5], 0
    %13 = vsyncpa [#allocation8], 0
    %14 = vsyncpa [#allocation11], 0
    %15 = vsyncpa [#allocation6], 0
    // Predicated region
    $region2: #{tpu_custom_call.1} parent=1 // pred_check
      _
    $region3: #{tpu_custom_call.1} parent=1 // pred_check_branch
      %17 = sbr.rel (0) target = $region5
    $region4: #{tpu_custom_call.1} parent=1 // pred_region
      %19 = vsyncadd [#allocation5], 0
      %s20 = sshll.u32 %s0, 4
      %s21 = int_to_ptr.hbm [resolvable:$true] %s20
      %s22 = sshll.u32 [#allocation4], 4
      %s23 = int_to_ptr.vmem [resolvable:$true] %s22
      %28 = dma.hbm_to_vmem [thread:$0]  %s21, 128, %s23, [#allocation5], 64, 64, 4
    $region5: #{tpu_custom_call.1} parent=1 // pred_fallthru
      _
    // Predicated region
    $region6: #{tpu_custom_call.1} parent=1 // pred_check
      _
    $region7: #{tpu_custom_call.1} parent=1 // pred_check_branch
      %30 = sbr.rel (0) target = $region9
    $region8: #{tpu_custom_call.1} parent=1 // pred_region
      %32 = vsyncadd [#allocation8], 0
      %s34 = sshll.u32 %s1, 4
      %s35 = int_to_ptr.hbm [resolvable:$true] %s34
      %s36 = sshll.u32 [#allocation7], 4
      %s37 = int_to_ptr.vmem [resolvable:$true] %s36
      %39 = dma.hbm_to_vmem [thread:$0]  %s35, 16, %s37, [#allocation8]
    $region9: #{tpu_custom_call.1} parent=1 // pred_fallthru
      _
    // Predicated region
    $region10: #{tpu_custom_call.1} parent=1 // pred_check
      _
    $region11: #{tpu_custom_call.1} parent=1 // pred_check_branch
      %41 = sbr.rel (0) target = $region13
    $region12: #{tpu_custom_call.1} parent=1 // pred_region
      _
    $region13: #{tpu_custom_call.1} parent=1 // pred_fallthru
      _
    // Predicated region
    $region14: #{tpu_custom_call.1} parent=1 // pred_check
      _
    $region15: #{tpu_custom_call.1} parent=1 // pred_check_branch
      %43 = sbr.rel (0) target = $region17
    $region16: #{tpu_custom_call.1} parent=1 // pred_region
      %45 = vsyncadd [#allocation8], 0
      %s46 = sshll.u32 %s3, 4
      %s47 = int_to_ptr.hbm [resolvable:$true] %s46
      %s48 = sshll.u32 [#allocation9], 4
      %s49 = int_to_ptr.vmem [resolvable:$true] %s48
      %54 = dma.hbm_to_vmem [thread:$0]  %s47, 1024, %s49, [#allocation8], 64, 64, 4
    $region17: #{tpu_custom_call.1} parent=1 // pred_fallthru
      _
    // Predicated region
    $region18: #{tpu_custom_call.1} parent=1 // pred_check
      _
    $region19: #{tpu_custom_call.1} parent=1 // pred_check_branch
      %56 = sbr.rel (0) target = $region21
    $region20: #{tpu_custom_call.1} parent=1 // pred_region
      _
    $region21: #{tpu_custom_call.1} parent=1 // pred_fallthru
      _
    // Predicated region
    $region22: #{tpu_custom_call.1} parent=1 // pred_check
      _
    $region23: #{tpu_custom_call.1} parent=1 // pred_check_branch
      %58 = sbr.rel (0) target = $region25
    $region24: #{tpu_custom_call.1} parent=1 // pred_region
      %60 = vsyncadd [#allocation11], 0
      %s61 = sshll.u32 %s5, 4
      %s62 = int_to_ptr.hbm [resolvable:$true] %s61
      %s63 = sshll.u32 [#allocation10], 4
      %s64 = int_to_ptr.vmem [resolvable:$true] %s63
      %69 = dma.hbm_to_vmem [thread:$0]  %s62, 1024, %s64, [#allocation11], 64, 64, 4
    $region25: #{tpu_custom_call.1} parent=1 // pred_fallthru
      _
    // Predicated region
    $region26: #{tpu_custom_call.1} parent=1 // pred_check
      _
    $region27: #{tpu_custom_call.1} parent=1 // pred_check_branch
      %71 = sbr.rel (0) target = $region29
    $region28: #{tpu_custom_call.1} parent=1 // pred_region
      _
    $region29: #{tpu_custom_call.1} parent=1 // pred_fallthru
      _
    // Predicated region
    $region30: #{tpu_custom_call.1} parent=1 // pred_check
      _
    $region31: #{tpu_custom_call.1} parent=1 // pred_check_branch
      %73 = sbr.rel (0) target = $region33
    $region32: #{tpu_custom_call.1} parent=1 // pred_region
      %75 = dma.done [#allocation5], 128
    $region33: #{tpu_custom_call.1} parent=1 // pred_fallthru
      _
    // Predicated region
    $region34: #{tpu_custom_call.1} parent=1 // pred_check
      _
    $region35: #{tpu_custom_call.1} parent=1 // pred_check_branch
      %77 = sbr.rel (0) target = $region37
    $region36: #{tpu_custom_call.1} parent=1 // pred_region
      %79 = dma.done [#allocation8], 16
    $region37: #{tpu_custom_call.1} parent=1 // pred_fallthru
      _
    // Predicated region
    $region38: #{tpu_custom_call.1} parent=1 // pred_check
      _
    $region39: #{tpu_custom_call.1} parent=1 // pred_check_branch
      %81 = sbr.rel (0) target = $region41
    $region40: #{tpu_custom_call.1} parent=1 // pred_region
      %83 = dma.done [#allocation8], 1024
    $region41: #{tpu_custom_call.1} parent=1 // pred_fallthru
      _
    // Predicated region
    $region42: #{tpu_custom_call.1} parent=1 // pred_check
      _
    $region43: #{tpu_custom_call.1} parent=1 // pred_check_branch
      %85 = sbr.rel (0) target = $region45
    $region44: #{tpu_custom_call.1} parent=1 // pred_region
      %87 = dma.done [#allocation11], 1024
    $region45: #{tpu_custom_call.1} parent=1 // pred_fallthru
      _
    %p88 = scmp.eq.s32.totalorder 0, 0
    // Predicated region
    $region46: #{tpu_custom_call.1} parent=1 // pred_check
      %p89 = pneg %p88
    $region47: #{tpu_custom_call.1} parent=1 // pred_check_branch
      %91 = sbr.rel (%p89) target = $region49
    $region48: #{tpu_custom_call.1} parent=1 // pred_region
      %v92 = vld [vmem:[#allocation4] sm:$0xf]
      %v93 = vld [vmem:[#allocation4 + $0x4] sm:$0xf]
      %v94 = vunpack.c.l.bf16 %v92
      %v95 = vunpack.c.l.bf16 %v93
      %96 = vadd.xlane.f32.xlu0 %v94
      %v97 = vpop.xlane.xlu0 %96
      %98 = vadd.xlane.f32.xlu0 %v95
      %v99 = vpop.xlane.xlu0 %98
      %v100 = vmul.f32 %v97, 0.03125
      %v101 = vmul.f32 %v99, 0.03125
      %v102 = vsub.f32 %v94, %v100
      %v103 = vsub.f32 %v95, %v101
      %v104 = vlaneseq
      %v105 = vand.u32 %v104, 127
      %vm106 = vcmp.lt.s32.totalorder %v105, 32
      %v107 = vsel %vm106, 1, 0
      %vm108 = vcmp.eq.s32.totalorder %v107, 1
      %v109 = vsel %vm108, %v102, 0.0
      %v110 = vsel %vm108, %v103, 0.0
      %v111 = vmul.f32 %v109, %v109
      %v112 = vmul.f32 %v110, %v110
      %113 = vadd.xlane.f32.xlu0 %v111
      %v114 = vpop.xlane.xlu0 %113
      %115 = vadd.xlane.f32.xlu0 %v112
      %v116 = vpop.xlane.xlu0 %115
      %v117 = vmul.f32 %v114, 0.03125
      %v118 = vmul.f32 %v116, 0.03125
      %v119 = vadd.f32 %v117, 1e-05
      %v120 = vadd.f32 %v118, 1e-05
      %v121 = vrsqrt.pop %v119
      %v122 = vmul.f32 %v121, %v119
      %v123 = vmul.f32 %v122, %v121
      %v124 = vmul.f32 0.5, %v123
      %v125 = vsub.f32 1.5, %v124
      %v126 = vmul.f32 %v121, %v125
      %vm127 = vweird.f32 %v119
      %vm128 = vweird.f32 %v121
      %vm129 = vmor %vm127, %vm128
      %v130 = vsel %vm129, %v121, %v126
      %v131 = vrsqrt.pop %v120
      %v132 = vmul.f32 %v131, %v120
      %v133 = vmul.f32 %v132, %v131
      %v134 = vmul.f32 0.5, %v133
      %v135 = vsub.f32 1.5, %v134
      %v136 = vmul.f32 %v131, %v135
      %vm137 = vweird.f32 %v120
      %vm138 = vweird.f32 %v131
      %vm139 = vmor %vm137, %vm138
      %v140 = vsel %vm139, %v131, %v136
      %v141 = vmul.f32 %v109, %v130
      %v142 = vmul.f32 %v110, %v140
      %v143 = vld [vmem:[#allocation7] sm:$0x1]
      %v145 = vperm.slane %v143, 0
      %v147 = vmul.f32 %v141, %v145
      %v148 = vmul.f32 %v142, %v145
      %v149 = vld [vmem:[%s2] sm:$0x1]
      %v151 = vperm.slane %v149, 0
      %v153 = vadd.f32 %v147, %v151
      %v154 = vadd.f32 %v148, %v151
      %v155 = vpack.c.bf16 %v153, %v153
      %v156 = vpack.c.bf16 %v154, %v154
      %157 = vst [vmem:[#allocation3] sm:$0xf] %v155
      %158 = vst [vmem:[#allocation3 + $0x4] sm:$0xf] %v156
      %159 = vst [vmem:[#allocation2] sm:$0xff] 0.0
      %160 = vst [vmem:[#allocation2 + $0x8] sm:$0xff] 0.0
    $region49: #{tpu_custom_call.1} parent=1 // pred_fallthru
      _
    %v161 = vld [vmem:[#allocation3] sm:$0xf]
    %v162 = vld [vmem:[#allocation3 + $0x4] sm:$0xf]
    %v163 = vld [vmem:[#allocation9] sm:$0xf]
    %v164 = vld [vmem:[#allocation9 + $0x4] sm:$0xf]
    %v165 = vld [vmem:[#allocation9 + $0x8] sm:$0xf]
    %v166 = vld [vmem:[#allocation9 + $0xc] sm:$0xf]
    %v167 = vld [vmem:[#allocation9 + $0x10] sm:$0xf]
    %v168 = vld [vmem:[#allocation9 + $0x14] sm:$0xf]
    %v169 = vld [vmem:[#allocation9 + $0x18] sm:$0xf]
    %v170 = vld [vmem:[#allocation9 + $0x1c] sm:$0xf]
    %v171 = vld [vmem:[#allocation9 + $0x20] sm:$0xf]
    %v172 = vld [vmem:[#allocation9 + $0x24] sm:$0xf]
    %v173 = vld [vmem:[#allocation9 + $0x28] sm:$0xf]
    %v174 = vld [vmem:[#allocation9 + $0x2c] sm:$0xf]
    %v175 = vld [vmem:[#allocation9 + $0x30] sm:$0xf]
    %v176 = vld [vmem:[#allocation9 + $0x34] sm:$0xf]
    %v177 = vld [vmem:[#allocation9 + $0x38] sm:$0xf]
    %v178 = vld [vmem:[#allocation9 + $0x3c] sm:$0xf]
    %v179 = vld [vmem:[%s4] sm:$0x1]
    %v181 = vperm.slane %v179, 0
    %v185 = vunpack.c.l.b16 %v161
    %v186 = vunpack.c.l.b16 %v162
    %v187 = vpack.c.b16 %v186, %v185
    %v205 = vunpack.c.l.b16 %v163
    %v206 = vunpack.c.l.b16 %v164
    %v207 = vunpack.c.l.b16 %v165
    %v208 = vunpack.c.l.b16 %v166
    %v209 = vunpack.c.l.b16 %v167
    %v210 = vunpack.c.l.b16 %v168
    %v211 = vunpack.c.l.b16 %v169
    %v212 = vunpack.c.l.b16 %v170
    %v213 = vunpack.c.l.b16 %v171
    %v214 = vunpack.c.l.b16 %v172
    %v215 = vunpack.c.l.b16 %v173
    %v216 = vunpack.c.l.b16 %v174
    %v217 = vunpack.c.l.b16 %v175
    %v218 = vunpack.c.l.b16 %v176
    %v219 = vunpack.c.l.b16 %v177
    %v220 = vunpack.c.l.b16 %v178
    %v221 = vpack.c.b16 %v206, %v205
    %v222 = vpack.c.b16 %v208, %v207
    %v223 = vpack.c.b16 %v210, %v209
    %v224 = vpack.c.b16 %v212, %v211
    %v225 = vpack.c.b16 %v214, %v213
    %v226 = vpack.c.b16 %v216, %v215
    %v227 = vpack.c.b16 %v218, %v217
    %v228 = vpack.c.b16 %v220, %v219
    %237 = vmatpush.bf16.msra.mxu0 %v228
    %238 = vmatpush.bf16.msra.mxu0 %v227
    %239 = vmatpush.bf16.msra.mxu0 %v226
    %240 = vmatpush.bf16.msra.mxu0 %v225
    %241 = vmatpush.bf16.msra.mxu0 %v224
    %242 = vmatpush.bf16.msra.mxu0 %v223
    %243 = vmatpush.bf16.msra.mxu0 %v222
    %244 = vmatpush.bf16.msra.mxu0 %v221
    %245 = vmatmul.bf16.gmra.mxu0 %v187
    %v246 = vpop.f32.mrf.mxu0
    %v247 = vadd.f32 %v181, %v246
    %v248 = vpop.f32.mrf.mxu0
    %v249 = vadd.f32 %v181, %v248
    %250 = vdwg.mxu0
    %v251 = vmul.f32 %v247, 0.5
    %v252 = vmul.f32 %v249, 0.5
    %v253 = vmul.f32 %v247, 0.70710677
    %v254 = vmul.f32 %v249, 0.70710677
    %v255 = vmul.f32 %v253, %v253
    %v256 = vmin.f32 16.0, %v255
    %v257 = vmul.f32 %v256, 2.1237322e-06
    %v258 = vadd.f32 %v257, 0.00028619796
    %v259 = vmul.f32 %v256, %v258
    %v260 = vadd.f32 %v259, 0.0036580483
    %v261 = vmul.f32 %v256, %v260
    %v262 = vadd.f32 %v261, 0.05243302
    %v263 = vmul.f32 %v256, %v262
    %v264 = vadd.f32 %v263, 0.18741608
    %v265 = vmul.f32 %v256, %v264
    %v266 = vadd.f32 %v265, 1.1283791
    %v267 = vmul.f32 %v253, %v266
    %v268 = vmul.f32 %v256, 3.8918573e-05
    %v269 = vadd.f32 %v268, 0.001143296
    %v270 = vmul.f32 %v256, %v269
    %v271 = vadd.f32 %v270, 0.014752088
    %v272 = vmul.f32 %v256, %v271
    %v273 = vadd.f32 %v272, 0.112945676
    %v274 = vmul.f32 %v256, %v273
    %v275 = vadd.f32 %v274, 0.4994258
    %v276 = vmul.f32 %v256, %v275
    %v277 = vadd.f32 %v276, 1.0
    %v278 = vrcp.pop %v277
    %v279 = vmul.f32 %v277, %v278
    %v280 = vsub.f32 1.0, %v279
    %v281 = vmul.f32 %v278, %v280
    %v282 = vadd.f32 %v278, %v281
    %vm283 = vweird.f32 %v277
    %vm284 = vweird.f32 %v278
    %vm285 = vmor %vm283, %vm284
    %v286 = vsel %vm285, %v278, %v282
    %v287 = vand.u32 2147483647, %v277
    %vm288 = vcmp.eq.f32.partialorder %v287, 8.507059e+37
    %v289 = vand.u32 %v277, 2147483648
    %v290 = vor.u32 1.1754944e-38, %v289
    %v291 = vsel %vm288, %v290, %v286
    %v292 = vmul.f32 %v267, %v291
    %v293 = vmin.f32 %v292, 1.0
    %v294 = vmax.f32 %v293, -1.0
    %v295 = vmul.f32 %v254, %v254
    %v296 = vmin.f32 16.0, %v295
    %v297 = vmul.f32 %v296, 2.1237322e-06
    %v298 = vadd.f32 %v297, 0.00028619796
    %v299 = vmul.f32 %v296, %v298
    %v300 = vadd.f32 %v299, 0.0036580483
    %v301 = vmul.f32 %v296, %v300
    %v302 = vadd.f32 %v301, 0.05243302
    %v303 = vmul.f32 %v296, %v302
    %v304 = vadd.f32 %v303, 0.18741608
    %v305 = vmul.f32 %v296, %v304
    %v306 = vadd.f32 %v305, 1.1283791
    %v307 = vmul.f32 %v254, %v306
    %v308 = vmul.f32 %v296, 3.8918573e-05
    %v309 = vadd.f32 %v308, 0.001143296
    %v310 = vmul.f32 %v296, %v309
    %v311 = vadd.f32 %v310, 0.014752088
    %v312 = vmul.f32 %v296, %v311
    %v313 = vadd.f32 %v312, 0.112945676
    %v314 = vmul.f32 %v296, %v313
    %v315 = vadd.f32 %v314, 0.4994258
    %v316 = vmul.f32 %v296, %v315
    %v317 = vadd.f32 %v316, 1.0
    %v318 = vrcp.pop %v317
    %v319 = vmul.f32 %v317, %v318
    %v320 = vsub.f32 1.0, %v319
    %v321 = vmul.f32 %v318, %v320
    %v322 = vadd.f32 %v318, %v321
    %vm323 = vweird.f32 %v317
    %vm324 = vweird.f32 %v318
    %vm325 = vmor %vm323, %vm324
    %v326 = vsel %vm325, %v318, %v322
    %v327 = vand.u32 2147483647, %v317
    %vm328 = vcmp.eq.f32.partialorder %v327, 8.507059e+37
    %v329 = vand.u32 %v317, 2147483648
    %v330 = vor.u32 1.1754944e-38, %v329
    %v331 = vsel %vm328, %v330, %v326
    %v332 = vmul.f32 %v307, %v331
    %v333 = vmin.f32 %v332, 1.0
    %v334 = vmax.f32 %v333, -1.0
    %v335 = vadd.f32 %v294, 1.0
    %v336 = vadd.f32 %v334, 1.0
    %v337 = vmul.f32 %v251, %v335
    %v338 = vmul.f32 %v252, %v336
    %v339 = vld [vmem:[#allocation2] sm:$0xff]
    %v340 = vld [vmem:[#allocation2 + $0x8] sm:$0xff]
    %v341 = vpack.c.bf16 %v338, %v337
    %v342 = vld [vmem:[#allocation10] sm:$0xf]
    %v343 = vld [vmem:[#allocation10 + $0x4] sm:$0xf]
    %v344 = vld [vmem:[#allocation10 + $0x8] sm:$0xf]
    %v345 = vld [vmem:[#allocation10 + $0xc] sm:$0xf]
    %v346 = vld [vmem:[#allocation10 + $0x10] sm:$0xf]
    %v347 = vld [vmem:[#allocation10 + $0x14] sm:$0xf]
    %v348 = vld [vmem:[#allocation10 + $0x18] sm:$0xf]
    %v349 = vld [vmem:[#allocation10 + $0x1c] sm:$0xf]
    %v350 = vld [vmem:[#allocation10 + $0x20] sm:$0xf]
    %v351 = vld [vmem:[#allocation10 + $0x24] sm:$0xf]
    %v352 = vld [vmem:[#allocation10 + $0x28] sm:$0xf]
    %v353 = vld [vmem:[#allocation10 + $0x2c] sm:$0xf]
    %v354 = vld [vmem:[#allocation10 + $0x30] sm:$0xf]
    %v355 = vld [vmem:[#allocation10 + $0x34] sm:$0xf]
    %v356 = vld [vmem:[#allocation10 + $0x38] sm:$0xf]
    %v357 = vld [vmem:[#allocation10 + $0x3c] sm:$0xf]
    %v374 = vunpack.c.l.b16 %v342
    %v375 = vunpack.c.l.b16 %v343
    %v376 = vunpack.c.l.b16 %v344
    %v377 = vunpack.c.l.b16 %v345
    %v378 = vunpack.c.l.b16 %v346
    %v379 = vunpack.c.l.b16 %v347
    %v380 = vunpack.c.l.b16 %v348
    %v381 = vunpack.c.l.b16 %v349
    %v382 = vunpack.c.l.b16 %v350
    %v383 = vunpack.c.l.b16 %v351
    %v384 = vunpack.c.l.b16 %v352
    %v385 = vunpack.c.l.b16 %v353
    %v386 = vunpack.c.l.b16 %v354
    %v387 = vunpack.c.l.b16 %v355
    %v388 = vunpack.c.l.b16 %v356
    %v389 = vunpack.c.l.b16 %v357
    %v390 = vpack.c.b16 %v375, %v374
    %v391 = vpack.c.b16 %v377, %v376
    %v392 = vpack.c.b16 %v379, %v378
    %v393 = vpack.c.b16 %v381, %v380
    %v394 = vpack.c.b16 %v383, %v382
    %v395 = vpack.c.b16 %v385, %v384
    %v396 = vpack.c.b16 %v387, %v386
    %v397 = vpack.c.b16 %v389, %v388
    %406 = vmatpush.bf16.msra.mxu0 %v397
    %407 = vmatpush.bf16.msra.mxu0 %v396
    %408 = vmatpush.bf16.msra.mxu0 %v395
    %409 = vmatpush.bf16.msra.mxu0 %v394
    %410 = vmatpush.bf16.msra.mxu0 %v393
    %411 = vmatpush.bf16.msra.mxu0 %v392
    %412 = vmatpush.bf16.msra.mxu0 %v391
    %413 = vmatpush.bf16.msra.mxu0 %v390
    %414 = vmatmul.bf16.gmra.mxu0 %v341
    %v415 = vpop.f32.mrf.mxu0
    %v416 = vadd.f32 0.0, %v415
    %v417 = vpop.f32.mrf.mxu0
    %v418 = vadd.f32 0.0, %v417
    %419 = vdwg.mxu0
    %v420 = vadd.f32 %v339, %v416
    %v421 = vadd.f32 %v340, %v418
    %422 = vst [vmem:[#allocation2] sm:$0xff] %v420
    %423 = vst [vmem:[#allocation2 + $0x8] sm:$0xff] %v421
    // Predicated region
    $region50: #{tpu_custom_call.1} parent=1 // pred_check
      %p424 = pneg %p88
    $region51: #{tpu_custom_call.1} parent=1 // pred_check_branch
      %426 = sbr.rel (%p424) target = $region53
    $region52: #{tpu_custom_call.1} parent=1 // pred_region
      %v427 = vld [vmem:[#allocation2] sm:$0xff]
      %v428 = vld [vmem:[#allocation2 + $0x8] sm:$0xff]
      %v429 = vld [vmem:[%s6] sm:$0x1]
      %v431 = vperm.slane %v429, 0
      %v433 = vadd.f32 %v427, %v431
      %v434 = vadd.f32 %v428, %v431
      %v435 = vpack.c.bf16 %v433, %v433
      %v436 = vpack.c.bf16 %v434, %v434
      %437 = vst [vmem:[#allocation12] sm:$0xf] %v435
      %438 = vst [vmem:[#allocation12 + $0x4] sm:$0xf] %v436
    $region53: #{tpu_custom_call.1} parent=1 // pred_fallthru
      _
    // Predicated region
    $region54: #{tpu_custom_call.1} parent=1 // pred_check
      _
    $region55: #{tpu_custom_call.1} parent=1 // pred_check_branch
      %440 = sbr.rel (0) target = $region57
    $region56: #{tpu_custom_call.1} parent=1 // pred_region
      %442 = vsyncadd [#allocation6], 0
      %s443 = sshll.u32 [#allocation12], 4
      %s444 = int_to_ptr.vmem [resolvable:$true] %s443
      %s445 = sshll.u32 %s7, 4
      %s446 = int_to_ptr.hbm [resolvable:$true] %s445
      %451 = dma.vmem_to_hbm [thread:$0]  %s444, 128, %s446, [#allocation6], 64, 64, 4
    $region57: #{tpu_custom_call.1} parent=1 // pred_fallthru
      _
    // Predicated region
    $region58: #{tpu_custom_call.1} parent=1 // pred_check
      _
    $region59: #{tpu_custom_call.1} parent=1 // pred_check_branch
      %453 = sbr.rel (0) target = $region61
    $region60: #{tpu_custom_call.1} parent=1 // pred_region
      %455 = dma.done [#allocation6], 128
    $region61: #{tpu_custom_call.1} parent=1 // pred_fallthru
      _
    %456 = vsyncpa [#allocation5], 1
    %457 = vsyncpa [#allocation8], 1
    %458 = vsyncpa [#allocation11], 1
    %459 = vsyncpa [#allocation6], 1

</llo_original>
